<compile_context>
chip_gen: v5e
topology: v5e:2x2
jax: 0.10.0
libtpu: 0.0.40
codegen_flags: <defaults>
</compile_context>

<pallas_src>
import jax
import jax.numpy as jnp
from jax.experimental import pallas as pl
from jax.experimental.pallas import tpu as pltpu


def _make_invconv_kernel(nb):
    def kernel(w_ref, x_ref, o_ref):
        # w_ref: (C, C) full 1x1-conv matrix, resident in VMEM.
        # x_ref/o_ref: (nb, C, t_hw) — spatial on the 128-lane axis.
        w = w_ref[...]
        # Static unroll over the small per-step batch block; each image is an
        # independent (C, t_hw) MXU matmul (out[o, p] = sum_c W[o, c] x[c, p]).
        for b in range(nb):
            o_ref[b] = jnp.dot(
                w, x_ref[b], preferred_element_type=jnp.float32
            ).astype(o_ref.dtype)

    return kernel


def _pick_tiles(n, c, hw, itemsize, cap):
    """Pick (nb, t_hw): images per grid step and spatial (lane) tile.

    Goals: >= ~1 MiB per direction per grid step (amortize pipeline overhead),
    <= 4 MiB per block (double-buffered in+out fits v7x's 32 MiB scoped VMEM),
    t_hw a multiple of 128 (or the full spatial extent), and >= 2 total grid
    steps whenever the problem allows (so both v7x TensorCores get work).
    """
    cap = max(128, int(cap))

    # --- spatial (lane) tile ---
    if hw <= cap:
        t_hw = hw  # full-dim block: legal even if not a multiple of 128
    else:
        cap_aligned = (cap // 128) * 128
        floor = max(1024, cap_aligned // 2)
        t_hw = cap_aligned  # default: large non-dividing tile, masked edge
        t = cap_aligned
        while t >= floor:
            if hw % t == 0:
                t_hw = t
                break
            t -= 128
    spatial_steps = -(-hw // t_hw)

    # --- batch block (nb images per grid step) ---
    tile_bytes = c * t_hw * itemsize
    target_bytes = 1 << 20   # >= ~1 MiB per direction per step
    max_block = 4 << 20      # keeps 2x(in+out) double-buffered << 32 MiB
    nb = 1
    if tile_bytes < target_bytes:
        for cand in range(2, n + 1):
            if n % cand:
                continue  # keep batch blocks exact (no masked batch edge)
            if cand * tile_bytes > max_block:
                break
            if (n // cand) * spatial_steps < 2:
                break  # keep >= 2 grid steps for v7x megacore
            nb = cand
            if nb * tile_bytes >= target_bytes:
                break

    # Single-step grid (n == 1 and one spatial tile): split the spatial tile
    # in two so both v7x TensorCores get work (harmless on v5e/v6e).
    if (n // nb) * spatial_steps < 2 and t_hw >= 256:
        t_hw = ((t_hw + 255) // 256) * 128  # ~half, 128-aligned

    return nb, t_hw


def invconv2d_forward(x, weight, *, spatial_tile_cap=16384):
    """x: (N, C, H, W), weight: (C, C) (the 1x1-conv matrix).

    Returns (out, logdet): out has shape (N, C, H, W) (== F.conv2d(x, W[...,None,None])),
    logdet = H * W * slogdet(W)[1] (scalar).
    """
    n, c, h, w = x.shape
    hw = h * w
    itemsize = jnp.dtype(x.dtype).itemsize
    nb, t_hw = _pick_tiles(n, c, hw, itemsize, spatial_tile_cap)

    # NCHW kept: (N, C, H, W) -> (N, C, H*W) is a free contiguous reshape.
    x3 = x.reshape(n, c, hw)

    grid = (pl.cdiv(n, nb), pl.cdiv(hw, t_hw))

    # Explicit VMEM budget: double-buffered in+out blocks + weight + margin,
    # clamped to [16 MiB, 32 MiB] (v7x scoped-safe; v5e/v6e have headroom).
    block_bytes = nb * c * t_hw * itemsize
    vmem_bytes = 4 * block_bytes + 2 * c * c * 4 + (4 << 20)
    vmem_bytes = int(min(max(vmem_bytes, 16 << 20), 32 << 20))

    out3 = pl.pallas_call(
        _make_invconv_kernel(nb),
        out_shape=jax.ShapeDtypeStruct((n, c, hw), x.dtype),
        grid_spec=pltpu.PrefetchScalarGridSpec(
            num_scalar_prefetch=0,
            grid=grid,
            in_specs=[
                # Whole (C, C) weight as one resident block (constant map).
                pl.BlockSpec((c, c), lambda bi, si: (0, 0)),
                # nb images, all channels, one lane-dense spatial tile.
                pl.BlockSpec((nb, c, t_hw), lambda bi, si: (bi, 0, si)),
            ],
            out_specs=pl.BlockSpec((nb, c, t_hw), lambda bi, si: (bi, 0, si)),
        ),
        compiler_params=pltpu.CompilerParams(
            # Both grid axes independent -> shards across v7x's 2 TCs.
            dimension_semantics=("parallel", "parallel"),
            vmem_limit_bytes=vmem_bytes,
        ),
    )(weight, x3)

    out = out3.reshape(n, c, h, w)  # free reshape back to NCHW

    # TODO(synk): PyTorch computes slogdet in float64; TPU default is float32,
    # so ill-conditioned weights late in training may drift slightly.
    logdet = (h * w) * jnp.linalg.slogdet(weight)[1].astype(jnp.float32)
    return out, logdet


def make_invconv_weight(key, in_channel):
    # Deterministic init mirroring the module: Q from QR of a random matrix.
    w0 = jax.random.normal(key, (in_channel, in_channel), dtype=jnp.float32)
    q, _ = jnp.linalg.qr(w0)
    return q  # (C, C); conceptually stored as (C, C, 1, 1) in the module


def _reference(x, weight):
    out = jnp.einsum("oc,nchw->nohw", weight, x)
    logdet = (x.shape[2] * x.shape[3]) * jnp.linalg.slogdet(weight)[1].astype(
        jnp.float32
    )
    return out, logdet


def _check(key, shape, *, spatial_tile_cap=16384):
    n, c, h, w = shape
    k_w, k_x = jax.random.split(key)
    weight = make_invconv_weight(k_w, c)
    x = jax.random.normal(k_x, shape, dtype=jnp.float32)

    out, logdet = invconv2d_forward(x, weight, spatial_tile_cap=spatial_tile_cap)
    out = jax.block_until_ready(out)
    logdet = jax.block_until_ready(logdet)

    ref_out, ref_logdet = _reference(x, weight)
    assert out.shape == shape, shape
    assert jnp.allclose(out, ref_out, atol=1e-5, rtol=1e-5), shape
    assert jnp.allclose(logdet, ref_logdet, atol=1e-5, rtol=1e-5), shape


if __name__ == "__main__":
    key = jax.random.PRNGKey(0)
    keys = jax.random.split(key, 4)

    # Primary case (Flow/InvConv2d at small Glow shapes).
    _check(keys[0], (2, 4, 16, 16))
    # hw = 529: not a multiple of 128 and > cap -> large non-dividing spatial
    # tile with a masked trailing block (locks in the fallback path).
    _check(keys[1], (2, 4, 23, 23), spatial_tile_cap=256)
    # hw = 64 < 128 (deep Glow level after squeezes) -> multi-image batch block.
    _check(keys[2], (4, 8, 8, 8))
    # hw = 4096 with a small cap -> several lane-dense spatial tiles, nb = 2.
    _check(keys[3], (2, 4, 64, 64), spatial_tile_cap=1024)

    print("KERNEL_OK")
</pallas_src>

<mosaic_0001>
module attributes {stable_mosaic.version = 11 : i64} {
  func.func @kernel(%arg0: i32, %arg1: i32, %arg2: memref<4x4xf32, #tpu.memory_space<vmem>>, %arg3: memref<1x4x256xf32, #tpu.memory_space<vmem>>, %arg4: memref<1x4x256xf32, #tpu.memory_space<vmem>>) attributes {dimension_semantics = [#tpu.dimension_semantics<parallel>, #tpu.dimension_semantics<parallel>], iteration_bounds = array<i64: 2, 1>, scalar_prefetch = 0 : i64, scratch_operands = 0 : i64, tpu.core_type = #tpu.core_type<tc>, window_params = [{pipeline_mode = #tpu.pipeline_mode<synchronous>, transform_indices = @transform_0, window_bounds = array<i64: 4, 4>}, {transform_indices = @transform_1, window_bounds = array<i64: 1, 4, 256>}, {transform_indices = @transform_2, window_bounds = array<i64: 1, 4, 256>}]} {
    %c0 = arith.constant 0 : index
    %c0_0 = arith.constant 0 : index
    %0 = vector.load %arg2[%c0, %c0_0] : memref<4x4xf32, #tpu.memory_space<vmem>>, vector<4x4xf32>
    %c0_1 = arith.constant 0 : index
    %c0_2 = arith.constant 0 : index
    %c0_3 = arith.constant 0 : index
    %1 = vector.load %arg3[%c0_1, %c0_2, %c0_3] : memref<1x4x256xf32, #tpu.memory_space<vmem>>, vector<1x4x256xf32>
    %2 = vector.shape_cast %1 : vector<1x4x256xf32> to vector<4x256xf32>
    %cst = arith.constant dense<0.000000e+00> : vector<4x256xf32>
    %3 = tpu.matmul %0, %2, %cst {dimension_numbers = #tpu.dot_dimension_numbers<[1], [0], [0], [1], [0, 0, 1, 1], [], []>} : vector<4x4xf32>, vector<4x256xf32>, vector<4x256xf32> -> vector<4x256xf32>
    %c0_4 = arith.constant 0 : index
    %c0_5 = arith.constant 0 : index
    %c0_6 = arith.constant 0 : index
    %4 = vector.load %arg4[%c0_4, %c0_5, %c0_6] : memref<1x4x256xf32, #tpu.memory_space<vmem>>, vector<1x4x256xf32>
    %5 = vector.shape_cast %4 : vector<1x4x256xf32> to vector<4x256xf32>
    %6 = vector.shape_cast %3 : vector<4x256xf32> to vector<1x4x256xf32>
    tpu.vector_store %arg4[%c0_4, %c0_5, %c0_6], %6 {strides = array<i32>} : memref<1x4x256xf32, #tpu.memory_space<vmem>>, vector<1x4x256xf32>,
    return
  }
  func.func @transform_0(%arg0: i32, %arg1: i32) -> (i32, i32) {
    %c0_i32 = arith.constant 0 : i32
    %c0_i32_0 = arith.constant 0 : i32
    %c0_i32_1 = arith.constant 0 : i32
    return %c0_i32, %c0_i32_0 : i32, i32
  }
  func.func @transform_1(%arg0: i32, %arg1: i32) -> (i32, i32, i32) {
    %c0_i32 = arith.constant 0 : i32
    %c0_i32_0 = arith.constant 0 : i32
    return %arg0, %c0_i32, %arg1 : i32, i32, i32
  }
  func.func @transform_2(%arg0: i32, %arg1: i32) -> (i32, i32, i32) {
    %c0_i32 = arith.constant 0 : i32
    %c0_i32_0 = arith.constant 0 : i32
    return %arg0, %c0_i32, %arg1 : i32, i32, i32
  }
}

</mosaic_0001>

<llo_original>
// kernel: tpu_custom_call.1
$region0: #{tpu_custom_call.1}
  #allocation0 [shape = 'u32[]', space=smem, size = 0x4, offset = 0x4, fixed_abs, tag = 'smem constant byte address 0x4 - core index']
  #allocation1 [shape = 'u32[72,128]{1,0:T(1,128)}', space=vmem, size = 0x9000, scoped, tag = 'internal scratch']
  %s0 = inlined_call_operand.hbm [shape: f32[4,4], index: 0, kind: input, shape index: {}]
  %s1 = inlined_call_operand.hbm [shape: f32[2,4,256], index: 1, kind: input, shape index: {}]
  %s2 = inlined_call_operand.hbm [shape: f32[2,4,256], index: 2, kind: output, shape index: {}]
  %s3 = sld [smem:[#allocation0]]
  $region49: #{tpu_custom_call.1} parent=0
    _
  %s5 = ssub.s32 1, %s3
  %s6 = scalar_select 0, %s5, %s3
  $region1: #{tpu_custom_call.1} parent=0
    #allocation2 [shape = 'u8[2048]{0}', space=vmem, size = 0x800, scoped, tag = 'input window, operand 0, single buffered']
    #allocation3 [shape = 's32[2]{0}', space=sflag, size = 0x8, scoped, tag = 'scoped memory for tpu_custom_call.1']
    #allocation4 [shape = 's32[2]{0}', space=sflag, size = 0x8, scoped, tag = 'scoped memory for tpu_custom_call.1']
    #allocation5 [shape = 'u8[8192]{0}', space=vmem, size = 0x2000, scoped, tag = 'input window, operand 1']
    #allocation6 [shape = 's32[2]{0}', space=sflag, size = 0x8, scoped, tag = 'scoped memory for tpu_custom_call.1']
    #allocation7 [shape = 'u8[8192]{0}', space=vmem, size = 0x2000, scoped, tag = 'output window, operand 0']
    %7 = vsyncpa [#allocation3], 0
    %8 = vsyncpa [#allocation6], 0
    %s9 = scalar_lea.sflag [#allocation6], 1
    %10 = vsyncpa %s9, 0
    %11 = vsyncpa [#allocation4], 0
    %s12 = scalar_lea.sflag [#allocation4], 1
    %13 = vsyncpa %s12, 0
    loop: start=0, step=1, limit=4
    $region2: #{tpu_custom_call.1} parent=1 // loop_pre_header
      _
    $region3: #{tpu_custom_call.1} parent=1 // loop_header
      %s15 = sphi 0, %s19
      %p16 = scmp.ge.s32.totalorder %s15, 4
      %s22 = sphi 0, %s34
      %s23 = sphi 0, %s30
      %s24 = sphi 0, %s22
      %s25 = sphi 0, %s23
      %s26 = sphi 0, %s24
      %s27 = sphi 0, %s25
      %s35 = sphi 0, %s35
      %s37 = sphi 0, %s35
      %s38 = sphi 0, %s37
      %s52 = sphi 0, %s38
      %s60 = sphi 0, %s62
      %s63 = sphi 0, %s60
      %s64 = sphi 0, %s63
      %s80 = sphi 0, %s64
      %s88 = sphi 0, %s90
      %s91 = sphi 0, %s88
      %s92 = sphi 0, %s91
      %s108 = sphi 0, %s92
    $region4: #{tpu_custom_call.1} parent=1 // loop_header_branch
      %18 = sbr.rel (%p16) target = $region8
    $region5: #{tpu_custom_call.1} parent=1 // loop_body
      %s20 = ssub.s32 %s15, 1
      %s21 = ssub.s32 %s15, 2
      %s28 = sadd.s32 1, %s23
      %p29 = scmp.ge.s32.totalorder %s28, 1
      %s30 = scalar_select %p29, 0, %s28
      %s31 = sadd.s32 1, %s22
      %s32 = scalar_select %p29, %s31, %s22
      %p33 = scmp.ge.s32.totalorder %s32, 2
      %s34 = scalar_select %p33, 0, %s32
      %s36 = sadd.s32 %s35, 1
      %p39 = scmp.eq.s32.totalorder %s15, 1
      %p40 = scmp.ne.s32.totalorder %s35, %s37
      %p41 = scmp.eq.s32.totalorder %s15, 0
      %p42 = por %p40, %p41
      %p43 = scmp.ne.s32.totalorder %s35, %s37
      %p44 = scmp.eq.s32.totalorder %s20, 1
      %p45 = por %p43, %p44
      %p46 = scmp.ne.s32.totalorder %s37, %s38
      %p47 = scmp.eq.s32.totalorder %s20, 0
      %p48 = por %p46, %p47
      %p49 = scmp.ne.s32.totalorder %s37, %s38
      %p50 = scmp.eq.s32.totalorder %s21, 1
      %p51 = por %p49, %p50
      %p53 = scmp.ne.s32.totalorder %s38, %s52
      %p54 = scmp.eq.s32.totalorder %s21, 0
      %p55 = por %p53, %p54
      %s56 = ssub.s32 %s22, %s34
      %s57 = ssub.s32 %s23, %s30
      %s58 = sor.u32 %s56, %s57
      %p59 = scmp.eq.s32.totalorder %s58, 0
      %s61 = sadd.s32 %s60, 1
      %s62 = scalar_select %p59, %s60, %s61
      %p65 = pneg %p59
      %p66 = scmp.eq.s32.totalorder %s15, 1
      %p67 = por %p65, %p66
      %p68 = scmp.ne.s32.totalorder %s60, %s63
      %p69 = scmp.eq.s32.totalorder %s15, 0
      %p70 = por %p68, %p69
      %p71 = scmp.ne.s32.totalorder %s60, %s63
      %p72 = scmp.eq.s32.totalorder %s20, 1
      %p73 = por %p71, %p72
      %p74 = scmp.ne.s32.totalorder %s63, %s64
      %p75 = scmp.eq.s32.totalorder %s20, 0
      %p76 = por %p74, %p75
      %p77 = scmp.ne.s32.totalorder %s63, %s64
      %p78 = scmp.eq.s32.totalorder %s21, 1
      %p79 = por %p77, %p78
      %p81 = scmp.ne.s32.totalorder %s64, %s80
      %p82 = scmp.eq.s32.totalorder %s21, 0
      %p83 = por %p81, %p82
      %s84 = ssub.s32 %s22, %s34
      %s85 = ssub.s32 %s23, %s30
      %s86 = sor.u32 %s84, %s85
      %p87 = scmp.eq.s32.totalorder %s86, 0
      %s89 = sadd.s32 %s88, 1
      %s90 = scalar_select %p87, %s88, %s89
      %p93 = pneg %p87
      %p94 = scmp.eq.s32.totalorder %s15, 1
      %p95 = por %p93, %p94
      %p96 = scmp.ne.s32.totalorder %s88, %s91
      %p97 = scmp.eq.s32.totalorder %s15, 0
      %p98 = por %p96, %p97
      %p99 = scmp.ne.s32.totalorder %s88, %s91
      %p100 = scmp.eq.s32.totalorder %s20, 1
      %p101 = por %p99, %p100
      %p102 = scmp.ne.s32.totalorder %s91, %s92
      %p103 = scmp.eq.s32.totalorder %s20, 0
      %p104 = por %p102, %p103
      %p105 = scmp.ne.s32.totalorder %s91, %s92
      %p106 = scmp.eq.s32.totalorder %s21, 1
      %p107 = por %p105, %p106
      %p109 = scmp.ne.s32.totalorder %s92, %s108
      %p110 = scmp.eq.s32.totalorder %s21, 0
      %p111 = por %p109, %p110
      %p112 = scmp.le.s32.totalorder 1, %s15
      %p113 = scmp.lt.s32.totalorder %s15, 3
      %p114 = pnand %p112, %p113
      %p115 = pneg %p114
      // Predicated region
      $region9: #{tpu_custom_call.1} parent=5 // pred_check
        _
      $region10: #{tpu_custom_call.1} parent=5 // pred_check_branch
        %117 = sbr.rel (%p114) target = $region12
      $region11: #{tpu_custom_call.1} parent=5 // pred_region
        %s118 = ssub.s32 %s15, 1
        // Predicated region
        $region13: #{tpu_custom_call.1} parent=11 // pred_check
          %p119 = pneg %p48
        $region14: #{tpu_custom_call.1} parent=11 // pred_check_branch
          %121 = sbr.rel (%p119) target = $region16
        $region15: #{tpu_custom_call.1} parent=11 // pred_region
          %123 = vsyncadd [#allocation3], 0
          %s125 = sshll.u32 %s0, 4
          %s126 = int_to_ptr.hbm [resolvable:$true] %s125
          %s127 = sshll.u32 [#allocation2], 4
          %s128 = int_to_ptr.vmem [resolvable:$true] %s127
          %130 = dma.hbm_to_vmem [thread:$0]  %s126, 64, %s128, [#allocation3]
        $region16: #{tpu_custom_call.1} parent=11 // pred_fallthru
          _
      $region12: #{tpu_custom_call.1} parent=5 // pred_fallthru
        _
      %p131 = scmp.lt.s32.totalorder %s15, 2
      // Predicated region
      $region17: #{tpu_custom_call.1} parent=5 // pred_check
        %p132 = pneg %p131
      $region18: #{tpu_custom_call.1} parent=5 // pred_check_branch
        %134 = sbr.rel (%p132) target = $region20
      $region19: #{tpu_custom_call.1} parent=5 // pred_region
        // Predicated region
        $region21: #{tpu_custom_call.1} parent=19 // pred_check
          %p135 = pneg %p70
        $region22: #{tpu_custom_call.1} parent=19 // pred_check_branch
          %137 = sbr.rel (%p135) target = $region24
        $region23: #{tpu_custom_call.1} parent=19 // pred_region
          %s138 = sand.u32 %s60, 1
          %s139 = scalar_lea.sflag [#allocation6], %s138
          %s140 = sand.u32 %s60, 1
          %s141 = smul.addr %s140, 8
          %s142 = scalar_lea.vmem [#allocation5], %s141
          %s143 = smul.u32 2, %s23
          %145 = vsyncadd %s139, 0
          %s146 = smul.addr %s22, 2
          %s147 = sadd.s32 %s143, %s146
          %s148 = smul.addr %s147, 4
          %s149 = scalar_lea.hbm %s1, %s148
          %s151 = sshll.u32 %s149, 4
          %s152 = int_to_ptr.hbm [resolvable:$true] %s151
          %s153 = sshll.u32 %s142, 4
          %s154 = int_to_ptr.vmem [resolvable:$true] %s153
          %156 = dma.hbm_to_vmem [thread:$0]  %s152, 128, %s154, %s139
        $region24: #{tpu_custom_call.1} parent=19 // pred_fallthru
          _
      $region20: #{tpu_custom_call.1} parent=5 // pred_fallthru
        _
      %p157 = scmp.le.s32.totalorder 1, %s15
      %p158 = scmp.lt.s32.totalorder %s15, 3
      %p159 = pnand %p157, %p158
      %p160 = pneg %p159
      // Predicated region
      $region25: #{tpu_custom_call.1} parent=5 // pred_check
        _
      $region26: #{tpu_custom_call.1} parent=5 // pred_check_branch
        %162 = sbr.rel (%p159) target = $region28
      $region27: #{tpu_custom_call.1} parent=5 // pred_region
        %s163 = ssub.s32 %s15, 1
        // Predicated region
        $region29: #{tpu_custom_call.1} parent=27 // pred_check
          %p164 = pneg %p48
        $region30: #{tpu_custom_call.1} parent=27 // pred_check_branch
          %166 = sbr.rel (%p164) target = $region32
        $region31: #{tpu_custom_call.1} parent=27 // pred_region
          %168 = dma.done [#allocation3], 64
        $region32: #{tpu_custom_call.1} parent=27 // pred_fallthru
          _
        %s169 = sand.u32 %s63, 1
        %s170 = scalar_lea.sflag [#allocation6], %s169
        %s171 = sand.u32 %s63, 1
        %s172 = smul.addr %s171, 8
        %s173 = scalar_lea.vmem [#allocation5], %s172
        // Predicated region
        $region33: #{tpu_custom_call.1} parent=27 // pred_check
          %p174 = pneg %p76
        $region34: #{tpu_custom_call.1} parent=27 // pred_check_branch
          %176 = sbr.rel (%p174) target = $region36
        $region35: #{tpu_custom_call.1} parent=27 // pred_region
          %178 = dma.done %s170, 128
        $region36: #{tpu_custom_call.1} parent=27 // pred_fallthru
          _
        %p179 = pneg %p48
        %p180 = pneg %p45
        %s181 = sand.u32 %s63, 1
        %s182 = scalar_lea.sflag [#allocation6], %s181
        %s183 = sand.u32 %s63, 1
        %s184 = smul.addr %s183, 8
        %s185 = scalar_lea.vmem [#allocation5], %s184
        %p186 = pneg %p76
        %p187 = pneg %p73
        %p188 = pneg %p104
        %p189 = pneg %p101
        %s190 = sand.u32 %s91, 1
        %s191 = scalar_lea.sflag [#allocation4], %s190
        %s192 = sand.u32 %s91, 1
        %s193 = smul.addr %s192, 8
        %s194 = scalar_lea.vmem [#allocation7], %s193
        %s195 = smul.u32 2, %s25
        %s196 = smul.u32 2, %s25
        %v197 = vld [vmem:[#allocation2] sm:$0xf]
        %v198 = vld [vmem:[%s173] sm:$0xff]
        %200 = vst [vmem:[#allocation1] ss:$2 sm:$0xff] %v198
        %v201 = vld.sshfl [vmem:[#allocation1] sm:$0xff pattern:$0x75316420]
        %v202 = vld.sshfl [vmem:[#allocation1 + $0x8] sm:$0xff pattern:$0x75316420]
        %vm203 = vcmask 31744
        %v205 = vsel %vm203, %v197, 0
        %vm207 = vcmask 1043456
        %v208 = vsel %vm207, %v201, 0
        %v210 = vsel %vm207, %v202, 0
        %212 = vmatpush.msra.mxu0 0.0
        %213 = vmatpush.msra.mxu0 0.0
        %214 = vmatpush.msra.mxu0 0.0
        %215 = vmatpush.msra.mxu0 0.0
        %216 = vmatpush.msra.mxu0 0.0
        %217 = vmatpush.msra.mxu0 0.0
        %218 = vmatpush.msra.mxu0 0.0
        %219 = vmatpush.msra.mxu0 0.0
        %220 = vmatpush.msra.mxu0 0.0
        %221 = vmatpush.msra.mxu0 0.0
        %222 = vmatpush.msra.mxu0 0.0
        %223 = vmatpush.msra.mxu0 0.0
        %224 = vmatpush.msra.mxu0 0.0
        %225 = vmatpush.msra.mxu0 0.0
        %226 = vmatpush.msra.mxu0 0.0
        %227 = vmatpush.msra.mxu0 %v208
        %228 = vmatmul.f32.gmra.mxu0 %v205
        %v229 = vpop.f32.mrf.mxu0
        %v230 = vadd.f32 0.0, %v229
        %231 = vdwg.mxu0
        %232 = vmatpush.msra.mxu0 0.0
        %233 = vmatpush.msra.mxu0 0.0
        %234 = vmatpush.msra.mxu0 0.0
        %235 = vmatpush.msra.mxu0 0.0
        %236 = vmatpush.msra.mxu0 0.0
        %237 = vmatpush.msra.mxu0 0.0
        %238 = vmatpush.msra.mxu0 0.0
        %239 = vmatpush.msra.mxu0 0.0
        %240 = vmatpush.msra.mxu0 0.0
        %241 = vmatpush.msra.mxu0 0.0
        %242 = vmatpush.msra.mxu0 0.0
        %243 = vmatpush.msra.mxu0 0.0
        %244 = vmatpush.msra.mxu0 0.0
        %245 = vmatpush.msra.mxu0 0.0
        %246 = vmatpush.msra.mxu0 0.0
        %247 = vmatpush.msra.mxu0 %v210
        %248 = vmatmul.f32.gmra.mxu0 %v205
        %v249 = vpop.f32.mrf.mxu0
        %v250 = vadd.f32 0.0, %v249
        %251 = vdwg.mxu0
        %v254 = vrot.slane %v250, 4
        %v255 = vsel %vm207, %v230, %v254
        %257 = vst [vmem:[%s194] sm:$0xff] %v255
        %s258 = sand.u32 %s91, 1
        %s259 = scalar_lea.sflag [#allocation4], %s258
        %s260 = sand.u32 %s91, 1
        %s261 = smul.addr %s260, 8
        %s262 = scalar_lea.vmem [#allocation7], %s261
        // Predicated region
        $region37: #{tpu_custom_call.1} parent=27 // pred_check
          %p263 = pneg %p101
        $region38: #{tpu_custom_call.1} parent=27 // pred_check_branch
          %265 = sbr.rel (%p263) target = $region40
        $region39: #{tpu_custom_call.1} parent=27 // pred_region
          %s266 = smul.u32 2, %s25
          %268 = vsyncadd %s259, 0
          %s269 = smul.addr %s24, 2
          %s270 = sadd.s32 %s266, %s269
          %s271 = smul.addr %s270, 4
          %s272 = scalar_lea.hbm %s2, %s271
          %s274 = sshll.u32 %s262, 4
          %s275 = int_to_ptr.vmem [resolvable:$true] %s274
          %s276 = sshll.u32 %s272, 4
          %s277 = int_to_ptr.hbm [resolvable:$true] %s276
          %279 = dma.vmem_to_hbm [thread:$0]  %s275, 128, %s277, %s259
        $region40: #{tpu_custom_call.1} parent=27 // pred_fallthru
          _
      $region28: #{tpu_custom_call.1} parent=5 // pred_fallthru
        _
      %p280 = scmp.le.s32.totalorder 2, %s15
      // Predicated region
      $region41: #{tpu_custom_call.1} parent=5 // pred_check
        %p281 = pneg %p280
      $region42: #{tpu_custom_call.1} parent=5 // pred_check_branch
        %283 = sbr.rel (%p281) target = $region44
      $region43: #{tpu_custom_call.1} parent=5 // pred_region
        %s284 = ssub.s32 %s15, 2
        // Predicated region
        $region45: #{tpu_custom_call.1} parent=43 // pred_check
          %p285 = pneg %p107
        $region46: #{tpu_custom_call.1} parent=43 // pred_check_branch
          %287 = sbr.rel (%p285) target = $region48
        $region47: #{tpu_custom_call.1} parent=43 // pred_region
          %s288 = sand.u32 %s92, 1
          %s289 = scalar_lea.sflag [#allocation4], %s288
          %s290 = sand.u32 %s92, 1
          %s291 = smul.addr %s290, 8
          %s292 = scalar_lea.vmem [#allocation7], %s291
          %294 = dma.done %s289, 128
        $region48: #{tpu_custom_call.1} parent=43 // pred_fallthru
          _
      $region44: #{tpu_custom_call.1} parent=5 // pred_fallthru
        _
    $region6: #{tpu_custom_call.1} parent=1 // loop_footer
      %s19 = sadd.s32 1, %s15
    $region7: #{tpu_custom_call.1} parent=1 // loop_footer_branch
      %14 = sbr.rel target = $region3
    $region8: #{tpu_custom_call.1} parent=1 // loop_exit
      _
    %295 = vsyncpa [#allocation3], 1
    %s296 = scalar_lea.sflag [#allocation3], 1
    %297 = vsyncpa %s296, 1
    %298 = vsyncpa [#allocation6], 1
    %s299 = scalar_lea.sflag [#allocation6], 1
    %300 = vsyncpa %s299, 1
    %301 = vsyncpa [#allocation4], 1
    %s302 = scalar_lea.sflag [#allocation4], 1
    %303 = vsyncpa %s302, 1

</llo_original>
